<compile_context>
chip_gen: v6e
topology: v6e:2x2x1
jax: 0.10.0
libtpu: 0.0.40
codegen_flags: <defaults>
</compile_context>

<pallas_src>
import jax
import jax.numpy as jnp
from jax.experimental import pallas as pl
from jax.experimental.pallas import tpu as pltpu


def similarity_kernel(h_ref, s_ref, wm_ref, wa_ref, b_ref, o_ref):
    h = h_ref[...]
    s = s_ref[...]
    # Elementwise hot path (VPU)
    mult_dist = h * s
    abs_dist = jnp.abs(h - s)
    # Split linear layer: two accumulating MXU pushes, no concatenate.
    z = jnp.dot(mult_dist, wm_ref[...], preferred_element_type=jnp.float32)
    z = z + jnp.dot(abs_dist, wa_ref[...], preferred_element_type=jnp.float32)
    z = z + b_ref[...]
    o_ref[...] = jax.nn.sigmoid(z).astype(o_ref.dtype)


def prepare_similarity_params(weight, bias):
    """One-time preprocessing of nn.Linear params.

    weight: (hidden_dim, 2*mem_dim)  (nn.Linear layout)
    bias:   (hidden_dim,)
    Returns (w_mult, w_abs, bias2d, hidden_dim) where
      w_mult, w_abs: (mem_dim, hidden_dim_padded)  zero-padded along columns
      bias2d:        (1, hidden_dim_padded)        zero-padded
    """
    hidden_dim, two_mem = weight.shape
    mem_dim = two_mem // 2
    h_pad = ((hidden_dim + 127) // 128) * 128  # lane-dense output width

    w_t = weight.T  # (2*mem_dim, hidden_dim)
    w_t = jnp.pad(w_t, ((0, 0), (0, h_pad - hidden_dim)))
    w_mult = w_t[:mem_dim]   # (mem_dim, h_pad)
    w_abs = w_t[mem_dim:]    # (mem_dim, h_pad)
    bias2d = jnp.pad(bias, (0, h_pad - hidden_dim)).reshape(1, h_pad)
    return w_mult, w_abs, bias2d, hidden_dim


def similarity_forward(hidden, state, w_mult, w_abs, bias2d, hidden_dim):
    """hidden, state: (B, mem_dim) f32. Returns (B, hidden_dim) f32."""
    B, mem_dim = hidden.shape
    h_pad = bias2d.shape[1]

    # Batch tile: large enough to amortize per-step overhead and feed the MXU,
    # small enough that double-buffered tiles fit comfortably in 64 MiB VMEM
    # (v7x): 2*(2*bt*mem_dim + bt*h_pad)*4 bytes << 32 MiB for bt=512.
    bt = 512 if B >= 512 else ((B + 7) // 8) * 8
    Bp = ((B + bt - 1) // bt) * bt
    if Bp != B:
        hidden = jnp.pad(hidden, ((0, Bp - B), (0, 0)))
        state = jnp.pad(state, ((0, Bp - B), (0, 0)))

    vmem = pltpu.MemorySpace.VMEM
    out = pl.pallas_call(
        similarity_kernel,
        out_shape=jax.ShapeDtypeStruct((Bp, h_pad), hidden.dtype),
        grid_spec=pltpu.PrefetchScalarGridSpec(
            num_scalar_prefetch=0,
            grid=(Bp // bt,),
            in_specs=[
                pl.BlockSpec((bt, mem_dim), lambda i: (i, 0), memory_space=vmem),
                pl.BlockSpec((bt, mem_dim), lambda i: (i, 0), memory_space=vmem),
                pl.BlockSpec((mem_dim, h_pad), lambda i: (0, 0), memory_space=vmem),
                pl.BlockSpec((mem_dim, h_pad), lambda i: (0, 0), memory_space=vmem),
                pl.BlockSpec((1, h_pad), lambda i: (0, 0), memory_space=vmem),
            ],
            out_specs=pl.BlockSpec((bt, h_pad), lambda i: (i, 0), memory_space=vmem),
        ),
        compiler_params=pltpu.CompilerParams(
            dimension_semantics=("parallel",),
            vmem_limit_bytes=32 * 1024 * 1024,
        ),
    )(hidden, state, w_mult, w_abs, bias2d)

    # Slice away batch padding and lane padding.
    return out[:B, :hidden_dim]


if __name__ == "__main__":
    B = 8
    mem_dim = 32
    hidden_dim = 32

    key = jax.random.PRNGKey(0)
    k_h, k_s, k_w, k_b = jax.random.split(key, 4)

    hidden = jax.random.normal(k_h, (B, mem_dim), dtype=jnp.float32)
    state = jax.random.normal(k_s, (B, mem_dim), dtype=jnp.float32)

    # Deterministic nn.Linear-style init: U(-1/sqrt(fan_in), 1/sqrt(fan_in))
    fan_in = 2 * mem_dim
    bound = 1.0 / (fan_in ** 0.5)
    weight = jax.random.uniform(
        k_w, (hidden_dim, 2 * mem_dim), minval=-bound, maxval=bound,
        dtype=jnp.float32)
    bias = jax.random.uniform(
        k_b, (hidden_dim,), minval=-bound, maxval=bound, dtype=jnp.float32)

    # One-time parameter prep (transpose / split / lane padding) hoisted out of
    # the per-call path.
    w_mult, w_abs, bias2d, hd = prepare_similarity_params(weight, bias)

    out = similarity_forward(hidden, state, w_mult, w_abs, bias2d, hd)
    out = jax.block_until_ready(out)

    # Pure-JAX reference check
    vec = jnp.concatenate([hidden * state, jnp.abs(hidden - state)], axis=1)
    ref = jax.nn.sigmoid(vec @ weight.T + bias)
    assert out.shape == (B, hidden_dim), "shape mismatch"
    assert jnp.allclose(out, ref, atol=1e-5, rtol=1e-5), "mismatch vs reference"

    print("KERNEL_OK")
</pallas_src>

<mosaic_0001>
module attributes {stable_mosaic.version = 11 : i64} {
  func.func @similarity_kernel(%arg0: i32, %arg1: memref<8x32xf32, #tpu.memory_space<vmem>>, %arg2: memref<8x32xf32, #tpu.memory_space<vmem>>, %arg3: memref<32x128xf32, #tpu.memory_space<vmem>>, %arg4: memref<32x128xf32, #tpu.memory_space<vmem>>, %arg5: memref<1x128xf32, #tpu.memory_space<vmem>>, %arg6: memref<8x128xf32, #tpu.memory_space<vmem>>) attributes {dimension_semantics = [#tpu.dimension_semantics<parallel>], iteration_bounds = array<i64: 1>, scalar_prefetch = 0 : i64, scratch_operands = 0 : i64, tpu.core_type = #tpu.core_type<tc>, window_params = [{transform_indices = @transform_0, window_bounds = array<i64: 8, 32>}, {transform_indices = @transform_1, window_bounds = array<i64: 8, 32>}, {pipeline_mode = #tpu.pipeline_mode<synchronous>, transform_indices = @transform_2, window_bounds = array<i64: 32, 128>}, {pipeline_mode = #tpu.pipeline_mode<synchronous>, transform_indices = @transform_3, window_bounds = array<i64: 32, 128>}, {pipeline_mode = #tpu.pipeline_mode<synchronous>, transform_indices = @transform_4, window_bounds = array<i64: 1, 128>}, {transform_indices = @transform_5, window_bounds = array<i64: 8, 128>}]} {
    %c0 = arith.constant 0 : index
    %c0_0 = arith.constant 0 : index
    %0 = vector.load %arg1[%c0, %c0_0] : memref<8x32xf32, #tpu.memory_space<vmem>>, vector<8x32xf32>
    %c0_1 = arith.constant 0 : index
    %c0_2 = arith.constant 0 : index
    %1 = vector.load %arg2[%c0_1, %c0_2] : memref<8x32xf32, #tpu.memory_space<vmem>>, vector<8x32xf32>
    %2 = arith.mulf %0, %1 : vector<8x32xf32>
    %3 = arith.subf %0, %1 : vector<8x32xf32>
    %4 = math.absf %3 : vector<8x32xf32>
    %c0_3 = arith.constant 0 : index
    %c0_4 = arith.constant 0 : index
    %5 = vector.load %arg3[%c0_3, %c0_4] : memref<32x128xf32, #tpu.memory_space<vmem>>, vector<32x128xf32>
    %cst = arith.constant dense<0.000000e+00> : vector<8x128xf32>
    %6 = tpu.matmul %2, %5, %cst {dimension_numbers = #tpu.dot_dimension_numbers<[1], [0], [0], [1], [0, 0, 1, 1], [], []>} : vector<8x32xf32>, vector<32x128xf32>, vector<8x128xf32> -> vector<8x128xf32>
    %c0_5 = arith.constant 0 : index
    %c0_6 = arith.constant 0 : index
    %7 = vector.load %arg4[%c0_5, %c0_6] : memref<32x128xf32, #tpu.memory_space<vmem>>, vector<32x128xf32>
    %cst_7 = arith.constant dense<0.000000e+00> : vector<8x128xf32>
    %8 = tpu.matmul %4, %7, %cst_7 {dimension_numbers = #tpu.dot_dimension_numbers<[1], [0], [0], [1], [0, 0, 1, 1], [], []>} : vector<8x32xf32>, vector<32x128xf32>, vector<8x128xf32> -> vector<8x128xf32>
    %9 = arith.addf %6, %8 : vector<8x128xf32>
    %c0_8 = arith.constant 0 : index
    %c0_9 = arith.constant 0 : index
    %10 = vector.load %arg5[%c0_8, %c0_9] : memref<1x128xf32, #tpu.memory_space<vmem>>, vector<1x128xf32>
    %11 = vector.broadcast %10 : vector<1x128xf32> to vector<8x128xf32>
    %12 = arith.addf %9, %11 : vector<8x128xf32>
    %13 = arith.negf %12 : vector<8x128xf32>
    %14 = math.exp %13 : vector<8x128xf32>
    %cst_10 = arith.constant 1.000000e+00 : f32
    %15 = vector.broadcast %cst_10 : f32 to vector<8x128xf32>
    %16 = arith.addf %15, %14 : vector<8x128xf32>
    %17 = arith.divf %15, %16 : vector<8x128xf32>
    %c0_11 = arith.constant 0 : index
    %c0_12 = arith.constant 0 : index
    %18 = vector.load %arg6[%c0_11, %c0_12] : memref<8x128xf32, #tpu.memory_space<vmem>>, vector<8x128xf32>
    tpu.vector_store %arg6[%c0_11, %c0_12], %17 {strides = array<i32>} : memref<8x128xf32, #tpu.memory_space<vmem>>, vector<8x128xf32>,
    return
  }
  func.func @transform_0(%arg0: i32) -> (i32, i32) {
    %c0_i32 = arith.constant 0 : i32
    %c0_i32_0 = arith.constant 0 : i32
    return %arg0, %c0_i32 : i32, i32
  }
  func.func @transform_1(%arg0: i32) -> (i32, i32) {
    %c0_i32 = arith.constant 0 : i32
    %c0_i32_0 = arith.constant 0 : i32
    return %arg0, %c0_i32 : i32, i32
  }
  func.func @transform_2(%arg0: i32) -> (i32, i32) {
    %c0_i32 = arith.constant 0 : i32
    %c0_i32_0 = arith.constant 0 : i32
    %c0_i32_1 = arith.constant 0 : i32
    return %c0_i32, %c0_i32_0 : i32, i32
  }
  func.func @transform_3(%arg0: i32) -> (i32, i32) {
    %c0_i32 = arith.constant 0 : i32
    %c0_i32_0 = arith.constant 0 : i32
    %c0_i32_1 = arith.constant 0 : i32
    return %c0_i32, %c0_i32_0 : i32, i32
  }
  func.func @transform_4(%arg0: i32) -> (i32, i32) {
    %c0_i32 = arith.constant 0 : i32
    %c0_i32_0 = arith.constant 0 : i32
    %c0_i32_1 = arith.constant 0 : i32
    return %c0_i32, %c0_i32_0 : i32, i32
  }
  func.func @transform_5(%arg0: i32) -> (i32, i32) {
    %c0_i32 = arith.constant 0 : i32
    %c0_i32_0 = arith.constant 0 : i32
    return %arg0, %c0_i32 : i32, i32
  }
}

</mosaic_0001>

<llo_original>
// kernel: tpu_custom_call.1
$region0: #{tpu_custom_call.1}
  #allocation0 [shape = 'u32[]', space=smem, size = 0x4, offset = 0x4, fixed_abs, tag = 'smem constant byte address 0x4 - core index']
  #allocation1 [shape = 'u32[144,128]{1,0:T(1,128)}', space=vmem, size = 0x12000, scoped, tag = 'internal scratch']
  %s0 = inlined_call_operand.hbm [shape: f32[8,32], index: 0, kind: input, shape index: {}]
  %s1 = inlined_call_operand.hbm [shape: f32[8,32], index: 1, kind: input, shape index: {}]
  %s2 = inlined_call_operand.hbm [shape: f32[32,128], index: 2, kind: input, shape index: {}]
  %s3 = inlined_call_operand.hbm [shape: f32[32,128], index: 3, kind: input, shape index: {}]
  %s4 = inlined_call_operand.vmem [shape: f32[1,128], index: 4, kind: input, shape index: {}]
  %s5 = inlined_call_operand.hbm [shape: f32[8,128], index: 5, kind: output, shape index: {}]
  %s6 = sld [smem:[#allocation0]]
  $region46: #{tpu_custom_call.1} parent=0
    _
  %s8 = ssub.s32 1, %s6
  %s9 = scalar_select 0, %s8, %s6
  $region1: #{tpu_custom_call.1} parent=0
    #allocation2 [shape = 'u8[4096]{0}', space=vmem, size = 0x1000, scoped, tag = 'input window, operand 0, single buffered']
    #allocation3 [shape = 's32[1]{0}', space=sflag, size = 0x4, scoped, tag = 'scoped memory for tpu_custom_call.1']
    #allocation4 [shape = 's32[1]{0}', space=sflag, size = 0x4, scoped, tag = 'scoped memory for tpu_custom_call.1']
    #allocation5 [shape = 'u8[4096]{0}', space=vmem, size = 0x1000, scoped, tag = 'input window, operand 1, single buffered']
    #allocation6 [shape = 's32[1]{0}', space=sflag, size = 0x4, scoped, tag = 'scoped memory for tpu_custom_call.1']
    #allocation7 [shape = 'u8[16384]{0}', space=vmem, size = 0x4000, scoped, tag = 'input window, operand 2, single buffered']
    #allocation8 [shape = 'u8[16384]{0}', space=vmem, size = 0x4000, scoped, tag = 'input window, operand 3, single buffered']
    #allocation9 [shape = 's32[1]{0}', space=sflag, size = 0x4, scoped, tag = 'scoped memory for tpu_custom_call.1']
    #allocation10 [shape = 'u8[4096]{0}', space=vmem, size = 0x1000, scoped, tag = 'output window, operand 0, single buffered']
    %10 = vsyncpa [#allocation3], 0
    %11 = vsyncpa [#allocation6], 0
    %12 = vsyncpa [#allocation9], 0
    %13 = vsyncpa [#allocation4], 0
    // Predicated region
    $region2: #{tpu_custom_call.1} parent=1 // pred_check
      _
    $region3: #{tpu_custom_call.1} parent=1 // pred_check_branch
      %15 = sbr.rel (0) target = $region5
    $region4: #{tpu_custom_call.1} parent=1 // pred_region
      %s17 = ssub.s32 128, 128
      %18 = vsyncadd [#allocation3], %s17
      %s20 = sshll.u32 [#allocation2], 4
      %s21 = int_to_ptr.vmem [resolvable:$true] %s20
      %23 = dma.hbm_to_vmem [thread:$0]  %s0, 128, %s21, [#allocation3]
    $region5: #{tpu_custom_call.1} parent=1 // pred_fallthru
      _
    // Predicated region
    $region6: #{tpu_custom_call.1} parent=1 // pred_check
      _
    $region7: #{tpu_custom_call.1} parent=1 // pred_check_branch
      %25 = sbr.rel (0) target = $region9
    $region8: #{tpu_custom_call.1} parent=1 // pred_region
      %s27 = ssub.s32 128, 128
      %28 = vsyncadd [#allocation6], %s27
      %s30 = sshll.u32 [#allocation5], 4
      %s31 = int_to_ptr.vmem [resolvable:$true] %s30
      %33 = dma.hbm_to_vmem [thread:$0]  %s1, 128, %s31, [#allocation6]
    $region9: #{tpu_custom_call.1} parent=1 // pred_fallthru
      _
    // Predicated region
    $region10: #{tpu_custom_call.1} parent=1 // pred_check
      _
    $region11: #{tpu_custom_call.1} parent=1 // pred_check_branch
      %35 = sbr.rel (0) target = $region13
    $region12: #{tpu_custom_call.1} parent=1 // pred_region
      %s37 = ssub.s32 512, 512
      %38 = vsyncadd [#allocation6], %s37
      %s39 = sshll.u32 [#allocation7], 4
      %s40 = int_to_ptr.vmem [resolvable:$true] %s39
      %45 = dma.hbm_to_vmem [thread:$0]  %s2, 512, %s40, [#allocation6], 128, 128, 8
    $region13: #{tpu_custom_call.1} parent=1 // pred_fallthru
      _
    // Predicated region
    $region14: #{tpu_custom_call.1} parent=1 // pred_check
      _
    $region15: #{tpu_custom_call.1} parent=1 // pred_check_branch
      %47 = sbr.rel (0) target = $region17
    $region16: #{tpu_custom_call.1} parent=1 // pred_region
      %s49 = ssub.s32 512, 512
      %50 = vsyncadd [#allocation9], %s49
      %s51 = sshll.u32 [#allocation8], 4
      %s52 = int_to_ptr.vmem [resolvable:$true] %s51
      %57 = dma.hbm_to_vmem [thread:$0]  %s3, 512, %s52, [#allocation9], 128, 128, 8
    $region17: #{tpu_custom_call.1} parent=1 // pred_fallthru
      _
    // Predicated region
    $region18: #{tpu_custom_call.1} parent=1 // pred_check
      _
    $region19: #{tpu_custom_call.1} parent=1 // pred_check_branch
      %59 = sbr.rel (0) target = $region21
    $region20: #{tpu_custom_call.1} parent=1 // pred_region
      _
    $region21: #{tpu_custom_call.1} parent=1 // pred_fallthru
      _
    // Predicated region
    $region22: #{tpu_custom_call.1} parent=1 // pred_check
      _
    $region23: #{tpu_custom_call.1} parent=1 // pred_check_branch
      %61 = sbr.rel (0) target = $region25
    $region24: #{tpu_custom_call.1} parent=1 // pred_region
      %62 = dma.done [#allocation3], 128
    $region25: #{tpu_custom_call.1} parent=1 // pred_fallthru
      _
    // Predicated region
    $region26: #{tpu_custom_call.1} parent=1 // pred_check
      _
    $region27: #{tpu_custom_call.1} parent=1 // pred_check_branch
      %64 = sbr.rel (0) target = $region29
    $region28: #{tpu_custom_call.1} parent=1 // pred_region
      %65 = dma.done [#allocation6], 128
    $region29: #{tpu_custom_call.1} parent=1 // pred_fallthru
      _
    // Predicated region
    $region30: #{tpu_custom_call.1} parent=1 // pred_check
      _
    $region31: #{tpu_custom_call.1} parent=1 // pred_check_branch
      %67 = sbr.rel (0) target = $region33
    $region32: #{tpu_custom_call.1} parent=1 // pred_region
      %68 = dma.done [#allocation6], 512
    $region33: #{tpu_custom_call.1} parent=1 // pred_fallthru
      _
    // Predicated region
    $region34: #{tpu_custom_call.1} parent=1 // pred_check
      _
    $region35: #{tpu_custom_call.1} parent=1 // pred_check_branch
      %70 = sbr.rel (0) target = $region37
    $region36: #{tpu_custom_call.1} parent=1 // pred_region
      %71 = dma.done [#allocation9], 512
    $region37: #{tpu_custom_call.1} parent=1 // pred_fallthru
      _
    %v72 = vld [vmem:[#allocation2] sm:$0xff]
    %v73 = vld [vmem:[#allocation5] sm:$0xff]
    %v74 = vmul.f32 %v72, %v73
    %v75 = vsub.f32 %v72, %v73
    %v76 = vand.u32 2147483647, %v75
    %v77 = vld [vmem:[#allocation7] sm:$0xff]
    %v78 = vld [vmem:[#allocation7 + $0x8] sm:$0xff]
    %v79 = vld [vmem:[#allocation7 + $0x10] sm:$0xff]
    %v80 = vld [vmem:[#allocation7 + $0x18] sm:$0xff]
    %v81 = vld [vmem:[#allocation8] sm:$0xff]
    %v82 = vld [vmem:[#allocation8 + $0x8] sm:$0xff]
    %v83 = vld [vmem:[#allocation8 + $0x10] sm:$0xff]
    %v84 = vld [vmem:[#allocation8 + $0x18] sm:$0xff]
    %vm85 = vcmask 261120
    %v87 = vsel %vm85, %v76, 0
    %89 = vmatprep.subr.mxu0 0.0
    %90 = vmatpush1.msra.mxu0 0.0
    %91 = vmatprep.subr.mxu0 0.0
    %92 = vmatpush1.msra.mxu0 0.0
    %93 = vmatprep.subr.mxu0 0.0
    %94 = vmatpush1.msra.mxu0 0.0
    %95 = vmatprep.subr.mxu0 0.0
    %96 = vmatpush1.msra.mxu0 0.0
    %97 = vmatprep.subr.mxu0 0.0
    %98 = vmatpush1.msra.mxu0 0.0
    %99 = vmatprep.subr.mxu0 0.0
    %100 = vmatpush1.msra.mxu0 0.0
    %101 = vmatprep.subr.mxu0 0.0
    %102 = vmatpush1.msra.mxu0 0.0
    %103 = vmatprep.subr.mxu0 0.0
    %104 = vmatpush1.msra.mxu0 0.0
    %105 = vmatprep.subr.mxu0 0.0
    %106 = vmatpush1.msra.mxu0 0.0
    %107 = vmatprep.subr.mxu0 0.0
    %108 = vmatpush1.msra.mxu0 0.0
    %109 = vmatprep.subr.mxu0 0.0
    %110 = vmatpush1.msra.mxu0 0.0
    %111 = vmatprep.subr.mxu0 0.0
    %112 = vmatpush1.msra.mxu0 0.0
    %113 = vmatprep.subr.mxu0 0.0
    %114 = vmatpush1.msra.mxu0 %v84
    %115 = vmatprep.subr.mxu0 0.0
    %116 = vmatpush1.msra.mxu0 %v83
    %117 = vmatprep.subr.mxu0 0.0
    %118 = vmatpush1.msra.mxu0 %v82
    %119 = vmatprep.subr.mxu0 0.0
    %120 = vmatpush1.msra.mxu0 %v81
    %121 = vmatprep.subr.mxu0 0.0
    %122 = vmatpush2.msra.mxu0 0.0
    %123 = vmatprep.subr.mxu0 0.0
    %124 = vmatpush2.msra.mxu0 0.0
    %125 = vmatprep.subr.mxu0 0.0
    %126 = vmatpush2.msra.mxu0 0.0
    %127 = vmatprep.subr.mxu0 0.0
    %128 = vmatpush2.msra.mxu0 0.0
    %129 = vmatprep.subr.mxu0 0.0
    %130 = vmatpush2.msra.mxu0 0.0
    %131 = vmatprep.subr.mxu0 0.0
    %132 = vmatpush2.msra.mxu0 0.0
    %133 = vmatprep.subr.mxu0 0.0
    %134 = vmatpush2.msra.mxu0 0.0
    %135 = vmatprep.subr.mxu0 0.0
    %136 = vmatpush2.msra.mxu0 0.0
    %137 = vmatprep.subr.mxu0 0.0
    %138 = vmatpush2.msra.mxu0 0.0
    %139 = vmatprep.subr.mxu0 0.0
    %140 = vmatpush2.msra.mxu0 0.0
    %141 = vmatprep.subr.mxu0 0.0
    %142 = vmatpush2.msra.mxu0 0.0
    %143 = vmatprep.subr.mxu0 0.0
    %144 = vmatpush2.msra.mxu0 0.0
    %145 = vmatprep.subr.mxu0 0.0
    %146 = vmatpush2.msra.mxu0 0.0
    %147 = vmatprep.subr.mxu0 0.0
    %148 = vmatpush2.msra.mxu0 0.0
    %149 = vmatprep.subr.mxu0 0.0
    %150 = vmatpush2.msra.mxu0 0.0
    %151 = vmatprep.subr.mxu0 0.0
    %152 = vmatpush2.msra.mxu0 0.0
    %153 = vmatprep.mubr.f32.mxu0 0.0
    %154 = vmatmul.mubr.f32.gmra.mxu0 %v87
    %v155 = vpop.f32.mrf.mxu0
    %v156 = vadd.f32 0.0, %v155
    %v157 = vpop.f32.mrf.mxu0
    %158 = vdwg.mxu0
    %v160 = vsel %vm85, %v74, 0
    %162 = vmatprep.subr.mxu0 0.0
    %163 = vmatpush1.msra.mxu0 0.0
    %164 = vmatprep.subr.mxu0 0.0
    %165 = vmatpush1.msra.mxu0 0.0
    %166 = vmatprep.subr.mxu0 0.0
    %167 = vmatpush1.msra.mxu0 0.0
    %168 = vmatprep.subr.mxu0 0.0
    %169 = vmatpush1.msra.mxu0 0.0
    %170 = vmatprep.subr.mxu0 0.0
    %171 = vmatpush1.msra.mxu0 0.0
    %172 = vmatprep.subr.mxu0 0.0
    %173 = vmatpush1.msra.mxu0 0.0
    %174 = vmatprep.subr.mxu0 0.0
    %175 = vmatpush1.msra.mxu0 0.0
    %176 = vmatprep.subr.mxu0 0.0
    %177 = vmatpush1.msra.mxu0 0.0
    %178 = vmatprep.subr.mxu0 0.0
    %179 = vmatpush1.msra.mxu0 0.0
    %180 = vmatprep.subr.mxu0 0.0
    %181 = vmatpush1.msra.mxu0 0.0
    %182 = vmatprep.subr.mxu0 0.0
    %183 = vmatpush1.msra.mxu0 0.0
    %184 = vmatprep.subr.mxu0 0.0
    %185 = vmatpush1.msra.mxu0 0.0
    %186 = vmatprep.subr.mxu0 0.0
    %187 = vmatpush1.msra.mxu0 %v80
    %188 = vmatprep.subr.mxu0 0.0
    %189 = vmatpush1.msra.mxu0 %v79
    %190 = vmatprep.subr.mxu0 0.0
    %191 = vmatpush1.msra.mxu0 %v78
    %192 = vmatprep.subr.mxu0 0.0
    %193 = vmatpush1.msra.mxu0 %v77
    %194 = vmatprep.subr.mxu0 0.0
    %195 = vmatpush2.msra.mxu0 0.0
    %196 = vmatprep.subr.mxu0 0.0
    %197 = vmatpush2.msra.mxu0 0.0
    %198 = vmatprep.subr.mxu0 0.0
    %199 = vmatpush2.msra.mxu0 0.0
    %200 = vmatprep.subr.mxu0 0.0
    %201 = vmatpush2.msra.mxu0 0.0
    %202 = vmatprep.subr.mxu0 0.0
    %203 = vmatpush2.msra.mxu0 0.0
    %204 = vmatprep.subr.mxu0 0.0
    %205 = vmatpush2.msra.mxu0 0.0
    %206 = vmatprep.subr.mxu0 0.0
    %207 = vmatpush2.msra.mxu0 0.0
    %208 = vmatprep.subr.mxu0 0.0
    %209 = vmatpush2.msra.mxu0 0.0
    %210 = vmatprep.subr.mxu0 0.0
    %211 = vmatpush2.msra.mxu0 0.0
    %212 = vmatprep.subr.mxu0 0.0
    %213 = vmatpush2.msra.mxu0 0.0
    %214 = vmatprep.subr.mxu0 0.0
    %215 = vmatpush2.msra.mxu0 0.0
    %216 = vmatprep.subr.mxu0 0.0
    %217 = vmatpush2.msra.mxu0 0.0
    %218 = vmatprep.subr.mxu0 0.0
    %219 = vmatpush2.msra.mxu0 0.0
    %220 = vmatprep.subr.mxu0 0.0
    %221 = vmatpush2.msra.mxu0 0.0
    %222 = vmatprep.subr.mxu0 0.0
    %223 = vmatpush2.msra.mxu0 0.0
    %224 = vmatprep.subr.mxu0 0.0
    %225 = vmatpush2.msra.mxu0 0.0
    %226 = vmatprep.mubr.f32.mxu0 0.0
    %227 = vmatmul.mubr.f32.gmra.mxu0 %v160
    %v228 = vpop.f32.mrf.mxu0
    %v229 = vadd.f32 %v156, %v228
    %v230 = vpop.f32.mrf.mxu0
    %231 = vdwg.mxu0
    %v232 = vld [vmem:[%s4] sm:$0x1]
    %v234 = vlaneseq
    %v235 = vshrl.u32 %v234, 7
    %v236 = vsub.s32 0, %v235
    %v237 = vrot.slane %v232, %v236
    %v239 = vadd.f32 %v229, %v237
    %v240 = vxor.u32 %v239, 2147483648
    %v241 = vmul.f32 %v240, 1.442695
    %v242 = vpow.pop %v241
    %v243 = vadd.f32 %v242, 1.0
    %v244 = vrcp.pop %v243
    %v245 = vmul.f32 1.0, %v244
    %246 = vst [vmem:[#allocation10] sm:$0xff] %v245
    // Predicated region
    $region38: #{tpu_custom_call.1} parent=1 // pred_check
      _
    $region39: #{tpu_custom_call.1} parent=1 // pred_check_branch
      %248 = sbr.rel (0) target = $region41
    $region40: #{tpu_custom_call.1} parent=1 // pred_region
      %s250 = ssub.s32 128, 128
      %251 = vsyncadd [#allocation4], %s250
      %s253 = sshll.u32 [#allocation10], 4
      %s254 = int_to_ptr.vmem [resolvable:$true] %s253
      %256 = dma.vmem_to_hbm [thread:$0]  %s254, 128, %s5, [#allocation4]
    $region41: #{tpu_custom_call.1} parent=1 // pred_fallthru
      _
    // Predicated region
    $region42: #{tpu_custom_call.1} parent=1 // pred_check
      _
    $region43: #{tpu_custom_call.1} parent=1 // pred_check_branch
      %258 = sbr.rel (0) target = $region45
    $region44: #{tpu_custom_call.1} parent=1 // pred_region
      %259 = dma.done [#allocation4], 128
    $region45: #{tpu_custom_call.1} parent=1 // pred_fallthru
      _
    %260 = vsyncpa [#allocation3], 1
    %261 = vsyncpa [#allocation6], 1
    %262 = vsyncpa [#allocation9], 1
    %263 = vsyncpa [#allocation4], 1

</llo_original>
